<compile_context>
chip_gen: v6e
topology: v6e:2x2x1
jax: 0.10.0
libtpu: 0.0.40
codegen_flags: <defaults>
</compile_context>

<pallas_src>
import jax
import jax.numpy as jnp
from jax.experimental import pallas as pl
from jax.experimental.pallas import tpu as pltpu


# ------------------------------- kernel -------------------------------------

def _qnet_twin_kernel(s_ref, a_ref,
                      ws1_ref, wa1_ref, b1_ref, w2_ref, b2_ref, w3p_ref,
                      ws2_ref, wa2_ref, b4_ref, w5_ref, b5_ref, w6p_ref,
                      b3f_ref, out_ref):
    """Twin-Q forward on one (TM, :) batch tile.

    6 MXU matmuls (bf16 operands, f32 accumulation); bias/ReLU kept in f32.
    """
    cdt = ws1_ref.dtype                      # matmul operand dtype (bf16)
    s = s_ref[...].astype(cdt)
    a = a_ref[...].astype(cdt)

    def hidden(ws_r, wa_r, bin_r, w2_r, b2_r):
        h = (jnp.dot(s, ws_r[...], preferred_element_type=jnp.float32)
             + jnp.dot(a, wa_r[...], preferred_element_type=jnp.float32)
             + bin_r[...])
        h = jnp.maximum(h, 0.0).astype(cdt)
        h = (jnp.dot(h, w2_r[...], preferred_element_type=jnp.float32)
             + b2_r[...])
        return jnp.maximum(h, 0.0).astype(cdt)

    h1 = hidden(ws1_ref, wa1_ref, b1_ref, w2_ref, b2_ref)
    h2 = hidden(ws2_ref, wa2_ref, b4_ref, w5_ref, b5_ref)

    # Layer 3: lane-disjoint padded weights -> single lane-dense (TM, 2) write.
    q = (jnp.dot(h1, w3p_ref[...], preferred_element_type=jnp.float32)
         + jnp.dot(h2, w6p_ref[...], preferred_element_type=jnp.float32)
         + b3f_ref[...])
    out_ref[...] = q.astype(out_ref.dtype)


# ----------------------------- param packing --------------------------------

def pack_qnetwork_params(params, state_dim, compute_dtype=jnp.bfloat16):
    """One-time repack/cast of raw twin-head params for the Pallas kernel.

    Call once per parameter update (NOT per forward) so no cast/concat/split
    XLA ops run on the forward hot path.
    """
    H = params["w2"].shape[0]
    c = lambda w: jnp.asarray(w, compute_dtype)
    f = lambda b: jnp.asarray(b, jnp.float32)
    zero_col = jnp.zeros((H, 1), compute_dtype)
    w3p = jnp.concatenate([c(params["w3"]), zero_col], axis=1)        # (H,2) = [w3|0]
    w6p = jnp.concatenate([zero_col, c(params["w6"])], axis=1)        # (H,2) = [0|w6]
    b3f = jnp.concatenate([f(params["b3"]), f(params["b6"])], axis=1) # (1,2)
    return dict(
        ws1=c(params["w1"][:state_dim]), wa1=c(params["w1"][state_dim:]),
        b1=f(params["b1"]),
        w2=c(params["w2"]), b2=f(params["b2"]), w3p=w3p,
        ws2=c(params["w4"][:state_dim]), wa2=c(params["w4"][state_dim:]),
        b4=f(params["b4"]),
        w5=c(params["w5"]), b5=f(params["b5"]), w6p=w6p,
        b3f=b3f,
    )


# ------------------------------- wrapper -------------------------------------

def _round_up(n, m):
    return ((n + m - 1) // m) * m


def _choose_tile(batch):
    """Batch tile: big enough to amortize ~0.35us/grid-step overhead, small
    enough that moderate batches still give >= 2 grid steps (v7x dual-TC)."""
    if batch <= 8:
        return 8
    return min(512, _round_up(pl.cdiv(batch, 2), 8))


@jax.jit
def _qnetwork_forward_impl(state, action, packed):
    B, state_dim = state.shape
    action_dim = action.shape[1]
    H = packed["w2"].shape[0]

    # NOTE: TM depends on B, so each distinct batch size compiles once; pin TM
    # for a fixed deployment batch if jit churn matters.
    TM = _choose_tile(B)
    B_pad = _round_up(B, TM)
    if B_pad != B:
        state = jnp.pad(state, ((0, B_pad - B), (0, 0)))
        action = jnp.pad(action, ((0, B_pad - B), (0, 0)))
    grid = (B_pad // TM,)

    def row_spec(feat):
        return pl.BlockSpec((TM, feat), lambda i: (i, 0))

    def resident(arr):
        return pl.BlockSpec(arr.shape, lambda i: (0, 0))

    weight_order = ("ws1", "wa1", "b1", "w2", "b2", "w3p",
                    "ws2", "wa2", "b4", "w5", "b5", "w6p", "b3f")
    weights = [packed[k] for k in weight_order]
    weight_bytes = sum(w.size * w.dtype.itemsize for w in weights)

    # Advisory cost hint so XLA schedules neighboring SAC-step ops around us.
    in_dim = state_dim + action_dim
    flops = 4 * B_pad * H * (in_dim + H + 2)
    bytes_accessed = B_pad * (in_dim + 2) * 4 + weight_bytes
    cost = pl.CostEstimate(flops=flops, transcendentals=0,
                           bytes_accessed=bytes_accessed)

    out = pl.pallas_call(
        _qnet_twin_kernel,
        out_shape=jax.ShapeDtypeStruct((B_pad, 2), jnp.float32),
        grid=grid,
        in_specs=[row_spec(state_dim), row_spec(action_dim)]
                 + [resident(w) for w in weights],
        out_specs=pl.BlockSpec((TM, 2), lambda i: (i, 0)),
        compiler_params=pltpu.CompilerParams(
            dimension_semantics=("parallel",)),
        cost_estimate=cost,
    )(state, action, *weights)

    out = out[:B]
    return out[:, 0:1], out[:, 1:2]


def qnetwork_forward(state, action, packed_params):
    """Pallas QNetwork.forward -> (q1, q2), each (B, 1).

    `packed_params` must come from pack_qnetwork_params (done once per param
    update, not per call).
    """
    return _qnetwork_forward_impl(state, action, packed_params)


# ----------------------------- init / reference -----------------------------

def xavier_uniform(key, shape_out_in):
    """Matches nn.init.xavier_uniform_ on a (out, in) weight; returns (in, out)."""
    fan_out, fan_in = shape_out_in
    limit = float(jnp.sqrt(6.0 / (fan_in + fan_out)))
    w = jax.random.uniform(key, shape_out_in, jnp.float32, -limit, limit)
    return w.T  # pre-transposed so the forward does x @ W


def init_params(key, state_dim, action_dim, hidden_dim):
    in_dim = state_dim + action_dim
    keys = jax.random.split(key, 6)
    shapes = [
        (hidden_dim, in_dim),      # linear1
        (hidden_dim, hidden_dim),  # linear2
        (1, hidden_dim),           # linear3
        (hidden_dim, in_dim),      # linear4
        (hidden_dim, hidden_dim),  # linear5
        (1, hidden_dim),           # linear6
    ]
    params = {}
    for i, (k, s) in enumerate(zip(keys, shapes), start=1):
        params[f"w{i}"] = xavier_uniform(k, s)
        params[f"b{i}"] = jnp.zeros((1, s[0]), jnp.float32)  # constant_(bias, 0.0)
    return params


def reference_forward(state, action, params, matmul_dtype=jnp.float32):
    """Pure-JAX reference of the PyTorch forward.

    With matmul_dtype=bf16 it mimics the kernel's bf16-operand / f32-accumulate
    matmuls for a tight correctness check.
    """
    def mm(x, w):
        return jnp.dot(x.astype(matmul_dtype), w.astype(matmul_dtype),
                       preferred_element_type=jnp.float32)
    x = jnp.concatenate([state, action], axis=1)
    h1 = jnp.maximum(mm(x, params["w1"]) + params["b1"], 0.0)
    h1 = jnp.maximum(mm(h1, params["w2"]) + params["b2"], 0.0)
    q1 = mm(h1, params["w3"]) + params["b3"]
    h2 = jnp.maximum(mm(x, params["w4"]) + params["b4"], 0.0)
    h2 = jnp.maximum(mm(h2, params["w5"]) + params["b5"], 0.0)
    q2 = mm(h2, params["w6"]) + params["b6"]
    return q1, q2


if __name__ == "__main__":
    state_dim, action_dim, hidden_dim, batch = 16, 8, 32, 8

    key = jax.random.PRNGKey(0)
    k_params, k_state, k_action = jax.random.split(key, 3)

    params = init_params(k_params, state_dim, action_dim, hidden_dim)
    packed = pack_qnetwork_params(params, state_dim)   # one-time repack / bf16 cast

    state = jax.random.normal(k_state, (batch, state_dim), jnp.float32)
    action = jax.random.normal(k_action, (batch, action_dim), jnp.float32)

    q1, q2 = qnetwork_forward(state, action, packed)
    jax.block_until_ready((q1, q2))
    assert q1.shape == (batch, 1) and q2.shape == (batch, 1)

    # tight check vs a reference using the same bf16-operand matmuls
    q1_bf, q2_bf = reference_forward(state, action, params, jnp.bfloat16)
    assert jnp.allclose(q1, q1_bf, atol=1e-3, rtol=1e-3)
    assert jnp.allclose(q2, q2_bf, atol=1e-3, rtol=1e-3)
    # loose sanity check vs the full-f32 reference (bf16 matmul rounding)
    q1_f32, q2_f32 = reference_forward(state, action, params)
    assert jnp.allclose(q1, q1_f32, atol=5e-2, rtol=5e-2)
    assert jnp.allclose(q2, q2_f32, atol=5e-2, rtol=5e-2)

    # non-tile-aligned larger batch: exercises padding + a >=2-step grid
    bigB = 300
    ks, ka = jax.random.split(jax.random.PRNGKey(1))
    s_big = jax.random.normal(ks, (bigB, state_dim), jnp.float32)
    a_big = jax.random.normal(ka, (bigB, action_dim), jnp.float32)
    q1b, q2b = qnetwork_forward(s_big, a_big, packed)
    jax.block_until_ready((q1b, q2b))
    q1b_bf, q2b_bf = reference_forward(s_big, a_big, params, jnp.bfloat16)
    assert jnp.allclose(q1b, q1b_bf, atol=1e-3, rtol=1e-3)
    assert jnp.allclose(q2b, q2b_bf, atol=1e-3, rtol=1e-3)

    # TODO(synk): q1_forward (single-head variant) can reuse head-1 weights with
    # the same kernel structure if ever needed; not part of forward().
    print("KERNEL_OK")
</pallas_src>

<mosaic_0001>
module attributes {stable_mosaic.version = 11 : i64} {
  func.func @_qnet_twin_kernel(%arg0: i32, %arg1: memref<8x16xf32, #tpu.memory_space<vmem>>, %arg2: memref<8x8xf32, #tpu.memory_space<vmem>>, %arg3: memref<16x32xbf16, #tpu.memory_space<vmem>>, %arg4: memref<8x32xbf16, #tpu.memory_space<vmem>>, %arg5: memref<1x32xf32, #tpu.memory_space<vmem>>, %arg6: memref<32x32xbf16, #tpu.memory_space<vmem>>, %arg7: memref<1x32xf32, #tpu.memory_space<vmem>>, %arg8: memref<32x2xbf16, #tpu.memory_space<vmem>>, %arg9: memref<16x32xbf16, #tpu.memory_space<vmem>>, %arg10: memref<8x32xbf16, #tpu.memory_space<vmem>>, %arg11: memref<1x32xf32, #tpu.memory_space<vmem>>, %arg12: memref<32x32xbf16, #tpu.memory_space<vmem>>, %arg13: memref<1x32xf32, #tpu.memory_space<vmem>>, %arg14: memref<32x2xbf16, #tpu.memory_space<vmem>>, %arg15: memref<1x2xf32, #tpu.memory_space<vmem>>, %arg16: memref<8x2xf32, #tpu.memory_space<vmem>>) attributes {dimension_semantics = [#tpu.dimension_semantics<parallel>], iteration_bounds = array<i64: 1>, scalar_prefetch = 0 : i64, scratch_operands = 0 : i64, tpu.core_type = #tpu.core_type<tc>, window_params = [{transform_indices = @transform_0, window_bounds = array<i64: 8, 16>}, {transform_indices = @transform_1, window_bounds = array<i64: 8, 8>}, {pipeline_mode = #tpu.pipeline_mode<synchronous>, transform_indices = @transform_2, window_bounds = array<i64: 16, 32>}, {pipeline_mode = #tpu.pipeline_mode<synchronous>, transform_indices = @transform_3, window_bounds = array<i64: 8, 32>}, {pipeline_mode = #tpu.pipeline_mode<synchronous>, transform_indices = @transform_4, window_bounds = array<i64: 1, 32>}, {pipeline_mode = #tpu.pipeline_mode<synchronous>, transform_indices = @transform_5, window_bounds = array<i64: 32, 32>}, {pipeline_mode = #tpu.pipeline_mode<synchronous>, transform_indices = @transform_6, window_bounds = array<i64: 1, 32>}, {pipeline_mode = #tpu.pipeline_mode<synchronous>, transform_indices = @transform_7, window_bounds = array<i64: 32, 2>}, {pipeline_mode = #tpu.pipeline_mode<synchronous>, transform_indices = @transform_8, window_bounds = array<i64: 16, 32>}, {pipeline_mode = #tpu.pipeline_mode<synchronous>, transform_indices = @transform_9, window_bounds = array<i64: 8, 32>}, {pipeline_mode = #tpu.pipeline_mode<synchronous>, transform_indices = @transform_10, window_bounds = array<i64: 1, 32>}, {pipeline_mode = #tpu.pipeline_mode<synchronous>, transform_indices = @transform_11, window_bounds = array<i64: 32, 32>}, {pipeline_mode = #tpu.pipeline_mode<synchronous>, transform_indices = @transform_12, window_bounds = array<i64: 1, 32>}, {pipeline_mode = #tpu.pipeline_mode<synchronous>, transform_indices = @transform_13, window_bounds = array<i64: 32, 2>}, {pipeline_mode = #tpu.pipeline_mode<synchronous>, transform_indices = @transform_14, window_bounds = array<i64: 1, 2>}, {transform_indices = @transform_15, window_bounds = array<i64: 8, 2>}]} {
    %c0 = arith.constant 0 : index
    %c0_0 = arith.constant 0 : index
    %0 = vector.load %arg1[%c0, %c0_0] : memref<8x16xf32, #tpu.memory_space<vmem>>, vector<8x16xf32>
    %1 = arith.truncf %0 : vector<8x16xf32> to vector<8x16xbf16>
    %c0_1 = arith.constant 0 : index
    %c0_2 = arith.constant 0 : index
    %2 = vector.load %arg2[%c0_1, %c0_2] : memref<8x8xf32, #tpu.memory_space<vmem>>, vector<8x8xf32>
    %3 = arith.truncf %2 : vector<8x8xf32> to vector<8x8xbf16>
    %c0_3 = arith.constant 0 : index
    %c0_4 = arith.constant 0 : index
    %4 = vector.load %arg3[%c0_3, %c0_4] : memref<16x32xbf16, #tpu.memory_space<vmem>>, vector<16x32xbf16>
    %cst = arith.constant dense<0.000000e+00> : vector<8x32xf32>
    %5 = tpu.matmul %1, %4, %cst {dimension_numbers = #tpu.dot_dimension_numbers<[1], [0], [0], [1], [0, 0, 1, 1], [], []>} : vector<8x16xbf16>, vector<16x32xbf16>, vector<8x32xf32> -> vector<8x32xf32>
    %c0_5 = arith.constant 0 : index
    %c0_6 = arith.constant 0 : index
    %6 = vector.load %arg4[%c0_5, %c0_6] : memref<8x32xbf16, #tpu.memory_space<vmem>>, vector<8x32xbf16>
    %cst_7 = arith.constant dense<0.000000e+00> : vector<8x32xf32>
    %7 = tpu.matmul %3, %6, %cst_7 {dimension_numbers = #tpu.dot_dimension_numbers<[1], [0], [0], [1], [0, 0, 1, 1], [], []>} : vector<8x8xbf16>, vector<8x32xbf16>, vector<8x32xf32> -> vector<8x32xf32>
    %8 = arith.addf %5, %7 : vector<8x32xf32>
    %c0_8 = arith.constant 0 : index
    %c0_9 = arith.constant 0 : index
    %9 = vector.load %arg5[%c0_8, %c0_9] : memref<1x32xf32, #tpu.memory_space<vmem>>, vector<1x32xf32>
    %10 = vector.broadcast %9 : vector<1x32xf32> to vector<8x32xf32>
    %11 = arith.addf %8, %10 : vector<8x32xf32>
    %cst_10 = arith.constant 0.000000e+00 : f32
    %12 = vector.broadcast %cst_10 : f32 to vector<8x32xf32>
    %13 = arith.maximumf %11, %12 : vector<8x32xf32>
    %14 = arith.truncf %13 : vector<8x32xf32> to vector<8x32xbf16>
    %c0_11 = arith.constant 0 : index
    %c0_12 = arith.constant 0 : index
    %15 = vector.load %arg6[%c0_11, %c0_12] : memref<32x32xbf16, #tpu.memory_space<vmem>>, vector<32x32xbf16>
    %cst_13 = arith.constant dense<0.000000e+00> : vector<8x32xf32>
    %16 = tpu.matmul %14, %15, %cst_13 {dimension_numbers = #tpu.dot_dimension_numbers<[1], [0], [0], [1], [0, 0, 1, 1], [], []>} : vector<8x32xbf16>, vector<32x32xbf16>, vector<8x32xf32> -> vector<8x32xf32>
    %c0_14 = arith.constant 0 : index
    %c0_15 = arith.constant 0 : index
    %17 = vector.load %arg7[%c0_14, %c0_15] : memref<1x32xf32, #tpu.memory_space<vmem>>, vector<1x32xf32>
    %18 = vector.broadcast %17 : vector<1x32xf32> to vector<8x32xf32>
    %19 = arith.addf %16, %18 : vector<8x32xf32>
    %cst_16 = arith.constant 0.000000e+00 : f32
    %20 = vector.broadcast %cst_16 : f32 to vector<8x32xf32>
    %21 = arith.maximumf %19, %20 : vector<8x32xf32>
    %22 = arith.truncf %21 : vector<8x32xf32> to vector<8x32xbf16>
    %c0_17 = arith.constant 0 : index
    %c0_18 = arith.constant 0 : index
    %23 = vector.load %arg9[%c0_17, %c0_18] : memref<16x32xbf16, #tpu.memory_space<vmem>>, vector<16x32xbf16>
    %cst_19 = arith.constant dense<0.000000e+00> : vector<8x32xf32>
    %24 = tpu.matmul %1, %23, %cst_19 {dimension_numbers = #tpu.dot_dimension_numbers<[1], [0], [0], [1], [0, 0, 1, 1], [], []>} : vector<8x16xbf16>, vector<16x32xbf16>, vector<8x32xf32> -> vector<8x32xf32>
    %c0_20 = arith.constant 0 : index
    %c0_21 = arith.constant 0 : index
    %25 = vector.load %arg10[%c0_20, %c0_21] : memref<8x32xbf16, #tpu.memory_space<vmem>>, vector<8x32xbf16>
    %cst_22 = arith.constant dense<0.000000e+00> : vector<8x32xf32>
    %26 = tpu.matmul %3, %25, %cst_22 {dimension_numbers = #tpu.dot_dimension_numbers<[1], [0], [0], [1], [0, 0, 1, 1], [], []>} : vector<8x8xbf16>, vector<8x32xbf16>, vector<8x32xf32> -> vector<8x32xf32>
    %27 = arith.addf %24, %26 : vector<8x32xf32>
    %c0_23 = arith.constant 0 : index
    %c0_24 = arith.constant 0 : index
    %28 = vector.load %arg11[%c0_23, %c0_24] : memref<1x32xf32, #tpu.memory_space<vmem>>, vector<1x32xf32>
    %29 = vector.broadcast %28 : vector<1x32xf32> to vector<8x32xf32>
    %30 = arith.addf %27, %29 : vector<8x32xf32>
    %cst_25 = arith.constant 0.000000e+00 : f32
    %31 = vector.broadcast %cst_25 : f32 to vector<8x32xf32>
    %32 = arith.maximumf %30, %31 : vector<8x32xf32>
    %33 = arith.truncf %32 : vector<8x32xf32> to vector<8x32xbf16>
    %c0_26 = arith.constant 0 : index
    %c0_27 = arith.constant 0 : index
    %34 = vector.load %arg12[%c0_26, %c0_27] : memref<32x32xbf16, #tpu.memory_space<vmem>>, vector<32x32xbf16>
    %cst_28 = arith.constant dense<0.000000e+00> : vector<8x32xf32>
    %35 = tpu.matmul %33, %34, %cst_28 {dimension_numbers = #tpu.dot_dimension_numbers<[1], [0], [0], [1], [0, 0, 1, 1], [], []>} : vector<8x32xbf16>, vector<32x32xbf16>, vector<8x32xf32> -> vector<8x32xf32>
    %c0_29 = arith.constant 0 : index
    %c0_30 = arith.constant 0 : index
    %36 = vector.load %arg13[%c0_29, %c0_30] : memref<1x32xf32, #tpu.memory_space<vmem>>, vector<1x32xf32>
    %37 = vector.broadcast %36 : vector<1x32xf32> to vector<8x32xf32>
    %38 = arith.addf %35, %37 : vector<8x32xf32>
    %cst_31 = arith.constant 0.000000e+00 : f32
    %39 = vector.broadcast %cst_31 : f32 to vector<8x32xf32>
    %40 = arith.maximumf %38, %39 : vector<8x32xf32>
    %41 = arith.truncf %40 : vector<8x32xf32> to vector<8x32xbf16>
    %c0_32 = arith.constant 0 : index
    %c0_33 = arith.constant 0 : index
    %42 = vector.load %arg8[%c0_32, %c0_33] : memref<32x2xbf16, #tpu.memory_space<vmem>>, vector<32x2xbf16>
    %cst_34 = arith.constant dense<0.000000e+00> : vector<8x2xf32>
    %43 = tpu.matmul %22, %42, %cst_34 {dimension_numbers = #tpu.dot_dimension_numbers<[1], [0], [0], [1], [0, 0, 1, 1], [], []>} : vector<8x32xbf16>, vector<32x2xbf16>, vector<8x2xf32> -> vector<8x2xf32>
    %c0_35 = arith.constant 0 : index
    %c0_36 = arith.constant 0 : index
    %44 = vector.load %arg14[%c0_35, %c0_36] : memref<32x2xbf16, #tpu.memory_space<vmem>>, vector<32x2xbf16>
    %cst_37 = arith.constant dense<0.000000e+00> : vector<8x2xf32>
    %45 = tpu.matmul %41, %44, %cst_37 {dimension_numbers = #tpu.dot_dimension_numbers<[1], [0], [0], [1], [0, 0, 1, 1], [], []>} : vector<8x32xbf16>, vector<32x2xbf16>, vector<8x2xf32> -> vector<8x2xf32>
    %46 = arith.addf %43, %45 : vector<8x2xf32>
    %c0_38 = arith.constant 0 : index
    %c0_39 = arith.constant 0 : index
    %47 = vector.load %arg15[%c0_38, %c0_39] : memref<1x2xf32, #tpu.memory_space<vmem>>, vector<1x2xf32>
    %48 = vector.broadcast %47 : vector<1x2xf32> to vector<8x2xf32>
    %49 = arith.addf %46, %48 : vector<8x2xf32>
    %c0_40 = arith.constant 0 : index
    %c0_41 = arith.constant 0 : index
    %50 = vector.load %arg16[%c0_40, %c0_41] : memref<8x2xf32, #tpu.memory_space<vmem>>, vector<8x2xf32>
    tpu.vector_store %arg16[%c0_40, %c0_41], %49 {strides = array<i32>} : memref<8x2xf32, #tpu.memory_space<vmem>>, vector<8x2xf32>,
    return
  }
  func.func @transform_0(%arg0: i32) -> (i32, i32) {
    %c0_i32 = arith.constant 0 : i32
    %c0_i32_0 = arith.constant 0 : i32
    return %arg0, %c0_i32 : i32, i32
  }
  func.func @transform_1(%arg0: i32) -> (i32, i32) {
    %c0_i32 = arith.constant 0 : i32
    %c0_i32_0 = arith.constant 0 : i32
    return %arg0, %c0_i32 : i32, i32
  }
  func.func @transform_2(%arg0: i32) -> (i32, i32) {
    %c0_i32 = arith.constant 0 : i32
    %c0_i32_0 = arith.constant 0 : i32
    %c0_i32_1 = arith.constant 0 : i32
    return %c0_i32, %c0_i32_0 : i32, i32
  }
  func.func @transform_3(%arg0: i32) -> (i32, i32) {
    %c0_i32 = arith.constant 0 : i32
    %c0_i32_0 = arith.constant 0 : i32
    %c0_i32_1 = arith.constant 0 : i32
    return %c0_i32, %c0_i32_0 : i32, i32
  }
  func.func @transform_4(%arg0: i32) -> (i32, i32) {
    %c0_i32 = arith.constant 0 : i32
    %c0_i32_0 = arith.constant 0 : i32
    %c0_i32_1 = arith.constant 0 : i32
    return %c0_i32, %c0_i32_0 : i32, i32
  }
  func.func @transform_5(%arg0: i32) -> (i32, i32) {
    %c0_i32 = arith.constant 0 : i32
    %c0_i32_0 = arith.constant 0 : i32
    %c0_i32_1 = arith.constant 0 : i32
    return %c0_i32, %c0_i32_0 : i32, i32
  }
  func.func @transform_6(%arg0: i32) -> (i32, i32) {
    %c0_i32 = arith.constant 0 : i32
    %c0_i32_0 = arith.constant 0 : i32
    %c0_i32_1 = arith.constant 0 : i32
    return %c0_i32, %c0_i32_0 : i32, i32
  }
  func.func @transform_7(%arg0: i32) -> (i32, i32) {
    %c0_i32 = arith.constant 0 : i32
    %c0_i32_0 = arith.constant 0 : i32
    %c0_i32_1 = arith.constant 0 : i32
    return %c0_i32, %c0_i32_0 : i32, i32
  }
  func.func @transform_8(%arg0: i32) -> (i32, i32) {
    %c0_i32 = arith.constant 0 : i32
    %c0_i32_0 = arith.constant 0 : i32
    %c0_i32_1 = arith.constant 0 : i32
    return %c0_i32, %c0_i32_0 : i32, i32
  }
  func.func @transform_9(%arg0: i32) -> (i32, i32) {
    %c0_i32 = arith.constant 0 : i32
    %c0_i32_0 = arith.constant 0 : i32
    %c0_i32_1 = arith.constant 0 : i32
    return %c0_i32, %c0_i32_0 : i32, i32
  }
  func.func @transform_10(%arg0: i32) -> (i32, i32) {
    %c0_i32 = arith.constant 0 : i32
    %c0_i32_0 = arith.constant 0 : i32
    %c0_i32_1 = arith.constant 0 : i32
    return %c0_i32, %c0_i32_0 : i32, i32
  }
  func.func @transform_11(%arg0: i32) -> (i32, i32) {
    %c0_i32 = arith.constant 0 : i32
    %c0_i32_0 = arith.constant 0 : i32
    %c0_i32_1 = arith.constant 0 : i32
    return %c0_i32, %c0_i32_0 : i32, i32
  }
  func.func @transform_12(%arg0: i32) -> (i32, i32) {
    %c0_i32 = arith.constant 0 : i32
    %c0_i32_0 = arith.constant 0 : i32
    %c0_i32_1 = arith.constant 0 : i32
    return %c0_i32, %c0_i32_0 : i32, i32
  }
  func.func @transform_13(%arg0: i32) -> (i32, i32) {
    %c0_i32 = arith.constant 0 : i32
    %c0_i32_0 = arith.constant 0 : i32
    %c0_i32_1 = arith.constant 0 : i32
    return %c0_i32, %c0_i32_0 : i32, i32
  }
  func.func @transform_14(%arg0: i32) -> (i32, i32) {
    %c0_i32 = arith.constant 0 : i32
    %c0_i32_0 = arith.constant 0 : i32
    %c0_i32_1 = arith.constant 0 : i32
    return %c0_i32, %c0_i32_0 : i32, i32
  }
  func.func @transform_15(%arg0: i32) -> (i32, i32) {
    %c0_i32 = arith.constant 0 : i32
    %c0_i32_0 = arith.constant 0 : i32
    return %arg0, %c0_i32 : i32, i32
  }
}

</mosaic_0001>

<llo_original>
// kernel: _qnetwork_forward_impl.1
$region0: #{_qnetwork_forward_impl.1}
  #allocation0 [shape = 'u32[]', space=smem, size = 0x4, offset = 0x4, fixed_abs, tag = 'smem constant byte address 0x4 - core index']
  #allocation1 [shape = 'u32[144,128]{1,0:T(1,128)}', space=vmem, size = 0x12000, scoped, tag = 'internal scratch']
  %s0 = inlined_call_operand.hbm [shape: f32[8,16], index: 0, kind: input, shape index: {}]
  %s1 = inlined_call_operand.hbm [shape: f32[8,8], index: 1, kind: input, shape index: {}]
  %s2 = inlined_call_operand.vmem [shape: bf16[16,32], index: 2, kind: input, shape index: {}]
  %s3 = inlined_call_operand.vmem [shape: bf16[8,32], index: 3, kind: input, shape index: {}]
  %s4 = inlined_call_operand.hbm [shape: f32[1,32], index: 4, kind: input, shape index: {}]
  %s5 = inlined_call_operand.vmem [shape: bf16[32,32], index: 5, kind: input, shape index: {}]
  %s6 = inlined_call_operand.hbm [shape: f32[1,32], index: 6, kind: input, shape index: {}]
  %s7 = inlined_call_operand.vmem [shape: bf16[32,2], index: 7, kind: input, shape index: {}]
  %s8 = inlined_call_operand.vmem [shape: bf16[16,32], index: 8, kind: input, shape index: {}]
  %s9 = inlined_call_operand.hbm [shape: bf16[8,32], index: 9, kind: input, shape index: {}]
  %s10 = inlined_call_operand.hbm [shape: f32[1,32], index: 10, kind: input, shape index: {}]
  %s11 = inlined_call_operand.vmem [shape: bf16[32,32], index: 11, kind: input, shape index: {}]
  %s12 = inlined_call_operand.hbm [shape: f32[1,32], index: 12, kind: input, shape index: {}]
  %s13 = inlined_call_operand.vmem [shape: bf16[32,2], index: 13, kind: input, shape index: {}]
  %s14 = inlined_call_operand.hbm [shape: f32[1,2], index: 14, kind: input, shape index: {}]
  %s15 = inlined_call_operand.vmem [shape: f32[8,2], index: 15, kind: output, shape index: {}]
  %s16 = sld [smem:[#allocation0]]
  $region102: #{_qnetwork_forward_impl.1} parent=0
    _
  %s18 = ssub.s32 1, %s16
  %s19 = scalar_select 0, %s18, %s16
  $region1: #{_qnetwork_forward_impl.1} parent=0
    #allocation2 [shape = 'u8[4096]{0}', space=vmem, size = 0x1000, scoped, tag = 'input window, operand 0, single buffered']
    #allocation3 [shape = 's32[1]{0}', space=sflag, size = 0x4, scoped, tag = 'scoped memory for _qnetwork_forward_impl.1']
    #allocation4 [shape = 'u8[4096]{0}', space=vmem, size = 0x1000, scoped, tag = 'input window, operand 1, single buffered']
    #allocation5 [shape = 's32[1]{0}', space=sflag, size = 0x4, scoped, tag = 'scoped memory for _qnetwork_forward_impl.1']
    #allocation6 [shape = 'u8[512]{0}', space=vmem, size = 0x400, scoped, tag = 'input window, operand 4, single buffered']
    #allocation7 [shape = 'u8[512]{0}', space=vmem, size = 0x400, scoped, tag = 'input window, operand 6, single buffered']
    #allocation8 [shape = 's32[1]{0}', space=sflag, size = 0x4, scoped, tag = 'scoped memory for _qnetwork_forward_impl.1']
    #allocation9 [shape = 'u8[2048]{0}', space=vmem, size = 0x800, scoped, tag = 'input window, operand 9, single buffered']
    #allocation10 [shape = 'u8[512]{0}', space=vmem, size = 0x400, scoped, tag = 'input window, operand 10, single buffered']
    #allocation11 [shape = 's32[1]{0}', space=sflag, size = 0x4, scoped, tag = 'scoped memory for _qnetwork_forward_impl.1']
    #allocation12 [shape = 'u8[512]{0}', space=vmem, size = 0x400, scoped, tag = 'input window, operand 12, single buffered']
    #allocation13 [shape = 'u8[512]{0}', space=vmem, size = 0x400, scoped, tag = 'input window, operand 14, single buffered']
    #allocation14 [shape = 's32[1]{0}', space=sflag, size = 0x4, scoped, tag = 'scoped memory for _qnetwork_forward_impl.1']
    %20 = vsyncpa [#allocation3], 0
    %21 = vsyncpa [#allocation5], 0
    %22 = vsyncpa [#allocation8], 0
    %23 = vsyncpa [#allocation11], 0
    %24 = vsyncpa [#allocation14], 0
    // Predicated region
    $region2: #{_qnetwork_forward_impl.1} parent=1 // pred_check
      _
    $region3: #{_qnetwork_forward_impl.1} parent=1 // pred_check_branch
      %26 = sbr.rel (0) target = $region5
    $region4: #{_qnetwork_forward_impl.1} parent=1 // pred_region
      %s28 = ssub.s32 128, 128
      %29 = vsyncadd [#allocation3], %s28
      %s31 = sshll.u32 [#allocation2], 4
      %s32 = int_to_ptr.vmem [resolvable:$true] %s31
      %34 = dma.hbm_to_vmem [thread:$0]  %s0, 128, %s32, [#allocation3]
    $region5: #{_qnetwork_forward_impl.1} parent=1 // pred_fallthru
      _
    // Predicated region
    $region6: #{_qnetwork_forward_impl.1} parent=1 // pred_check
      _
    $region7: #{_qnetwork_forward_impl.1} parent=1 // pred_check_branch
      %36 = sbr.rel (0) target = $region9
    $region8: #{_qnetwork_forward_impl.1} parent=1 // pred_region
      %s38 = ssub.s32 128, 128
      %39 = vsyncadd [#allocation5], %s38
      %s41 = sshll.u32 [#allocation4], 4
      %s42 = int_to_ptr.vmem [resolvable:$true] %s41
      %44 = dma.hbm_to_vmem [thread:$0]  %s1, 128, %s42, [#allocation5]
    $region9: #{_qnetwork_forward_impl.1} parent=1 // pred_fallthru
      _
    // Predicated region
    $region10: #{_qnetwork_forward_impl.1} parent=1 // pred_check
      _
    $region11: #{_qnetwork_forward_impl.1} parent=1 // pred_check_branch
      %46 = sbr.rel (0) target = $region13
    $region12: #{_qnetwork_forward_impl.1} parent=1 // pred_region
      _
    $region13: #{_qnetwork_forward_impl.1} parent=1 // pred_fallthru
      _
    // Predicated region
    $region14: #{_qnetwork_forward_impl.1} parent=1 // pred_check
      _
    $region15: #{_qnetwork_forward_impl.1} parent=1 // pred_check_branch
      %48 = sbr.rel (0) target = $region17
    $region16: #{_qnetwork_forward_impl.1} parent=1 // pred_region
      _
    $region17: #{_qnetwork_forward_impl.1} parent=1 // pred_fallthru
      _
    // Predicated region
    $region18: #{_qnetwork_forward_impl.1} parent=1 // pred_check
      _
    $region19: #{_qnetwork_forward_impl.1} parent=1 // pred_check_branch
      %50 = sbr.rel (0) target = $region21
    $region20: #{_qnetwork_forward_impl.1} parent=1 // pred_region
      %s52 = ssub.s32 16, 16
      %53 = vsyncadd [#allocation5], %s52
      %s55 = sshll.u32 [#allocation6], 4
      %s56 = int_to_ptr.vmem [resolvable:$true] %s55
      %58 = dma.hbm_to_vmem [thread:$0]  %s4, 16, %s56, [#allocation5]
    $region21: #{_qnetwork_forward_impl.1} parent=1 // pred_fallthru
      _
    // Predicated region
    $region22: #{_qnetwork_forward_impl.1} parent=1 // pred_check
      _
    $region23: #{_qnetwork_forward_impl.1} parent=1 // pred_check_branch
      %60 = sbr.rel (0) target = $region25
    $region24: #{_qnetwork_forward_impl.1} parent=1 // pred_region
      _
    $region25: #{_qnetwork_forward_impl.1} parent=1 // pred_fallthru
      _
    // Predicated region
    $region26: #{_qnetwork_forward_impl.1} parent=1 // pred_check
      _
    $region27: #{_qnetwork_forward_impl.1} parent=1 // pred_check_branch
      %62 = sbr.rel (0) target = $region29
    $region28: #{_qnetwork_forward_impl.1} parent=1 // pred_region
      %s64 = ssub.s32 16, 16
      %65 = vsyncadd [#allocation8], %s64
      %s67 = sshll.u32 [#allocation7], 4
      %s68 = int_to_ptr.vmem [resolvable:$true] %s67
      %70 = dma.hbm_to_vmem [thread:$0]  %s6, 16, %s68, [#allocation8]
    $region29: #{_qnetwork_forward_impl.1} parent=1 // pred_fallthru
      _
    // Predicated region
    $region30: #{_qnetwork_forward_impl.1} parent=1 // pred_check
      _
    $region31: #{_qnetwork_forward_impl.1} parent=1 // pred_check_branch
      %72 = sbr.rel (0) target = $region33
    $region32: #{_qnetwork_forward_impl.1} parent=1 // pred_region
      _
    $region33: #{_qnetwork_forward_impl.1} parent=1 // pred_fallthru
      _
    // Predicated region
    $region34: #{_qnetwork_forward_impl.1} parent=1 // pred_check
      _
    $region35: #{_qnetwork_forward_impl.1} parent=1 // pred_check_branch
      %74 = sbr.rel (0) target = $region37
    $region36: #{_qnetwork_forward_impl.1} parent=1 // pred_region
      _
    $region37: #{_qnetwork_forward_impl.1} parent=1 // pred_fallthru
      _
    // Predicated region
    $region38: #{_qnetwork_forward_impl.1} parent=1 // pred_check
      _
    $region39: #{_qnetwork_forward_impl.1} parent=1 // pred_check_branch
      %76 = sbr.rel (0) target = $region41
    $region40: #{_qnetwork_forward_impl.1} parent=1 // pred_region
      %s78 = ssub.s32 64, 64
      %79 = vsyncadd [#allocation8], %s78
      %s81 = sshll.u32 [#allocation9], 4
      %s82 = int_to_ptr.vmem [resolvable:$true] %s81
      %84 = dma.hbm_to_vmem [thread:$0]  %s9, 64, %s82, [#allocation8]
    $region41: #{_qnetwork_forward_impl.1} parent=1 // pred_fallthru
      _
    // Predicated region
    $region42: #{_qnetwork_forward_impl.1} parent=1 // pred_check
      _
    $region43: #{_qnetwork_forward_impl.1} parent=1 // pred_check_branch
      %86 = sbr.rel (0) target = $region45
    $region44: #{_qnetwork_forward_impl.1} parent=1 // pred_region
      %s88 = ssub.s32 16, 16
      %89 = vsyncadd [#allocation11], %s88
      %s91 = sshll.u32 [#allocation10], 4
      %s92 = int_to_ptr.vmem [resolvable:$true] %s91
      %94 = dma.hbm_to_vmem [thread:$0]  %s10, 16, %s92, [#allocation11]
    $region45: #{_qnetwork_forward_impl.1} parent=1 // pred_fallthru
      _
    // Predicated region
    $region46: #{_qnetwork_forward_impl.1} parent=1 // pred_check
      _
    $region47: #{_qnetwork_forward_impl.1} parent=1 // pred_check_branch
      %96 = sbr.rel (0) target = $region49
    $region48: #{_qnetwork_forward_impl.1} parent=1 // pred_region
      _
    $region49: #{_qnetwork_forward_impl.1} parent=1 // pred_fallthru
      _
    // Predicated region
    $region50: #{_qnetwork_forward_impl.1} parent=1 // pred_check
      _
    $region51: #{_qnetwork_forward_impl.1} parent=1 // pred_check_branch
      %98 = sbr.rel (0) target = $region53
    $region52: #{_qnetwork_forward_impl.1} parent=1 // pred_region
      %s100 = ssub.s32 16, 16
      %101 = vsyncadd [#allocation11], %s100
      %s103 = sshll.u32 [#allocation12], 4
      %s104 = int_to_ptr.vmem [resolvable:$true] %s103
      %106 = dma.hbm_to_vmem [thread:$0]  %s12, 16, %s104, [#allocation11]
    $region53: #{_qnetwork_forward_impl.1} parent=1 // pred_fallthru
      _
    // Predicated region
    $region54: #{_qnetwork_forward_impl.1} parent=1 // pred_check
      _
    $region55: #{_qnetwork_forward_impl.1} parent=1 // pred_check_branch
      %108 = sbr.rel (0) target = $region57
    $region56: #{_qnetwork_forward_impl.1} parent=1 // pred_region
      _
    $region57: #{_qnetwork_forward_impl.1} parent=1 // pred_fallthru
      _
    // Predicated region
    $region58: #{_qnetwork_forward_impl.1} parent=1 // pred_check
      _
    $region59: #{_qnetwork_forward_impl.1} parent=1 // pred_check_branch
      %110 = sbr.rel (0) target = $region61
    $region60: #{_qnetwork_forward_impl.1} parent=1 // pred_region
      %s112 = ssub.s32 16, 16
      %113 = vsyncadd [#allocation14], %s112
      %s115 = sshll.u32 [#allocation13], 4
      %s116 = int_to_ptr.vmem [resolvable:$true] %s115
      %118 = dma.hbm_to_vmem [thread:$0]  %s14, 16, %s116, [#allocation14]
    $region61: #{_qnetwork_forward_impl.1} parent=1 // pred_fallthru
      _
    // Predicated region
    $region62: #{_qnetwork_forward_impl.1} parent=1 // pred_check
      _
    $region63: #{_qnetwork_forward_impl.1} parent=1 // pred_check_branch
      %120 = sbr.rel (0) target = $region65
    $region64: #{_qnetwork_forward_impl.1} parent=1 // pred_region
      %121 = dma.done [#allocation3], 128
    $region65: #{_qnetwork_forward_impl.1} parent=1 // pred_fallthru
      _
    // Predicated region
    $region66: #{_qnetwork_forward_impl.1} parent=1 // pred_check
      _
    $region67: #{_qnetwork_forward_impl.1} parent=1 // pred_check_branch
      %123 = sbr.rel (0) target = $region69
    $region68: #{_qnetwork_forward_impl.1} parent=1 // pred_region
      %124 = dma.done [#allocation5], 128
    $region69: #{_qnetwork_forward_impl.1} parent=1 // pred_fallthru
      _
    // Predicated region
    $region70: #{_qnetwork_forward_impl.1} parent=1 // pred_check
      _
    $region71: #{_qnetwork_forward_impl.1} parent=1 // pred_check_branch
      %126 = sbr.rel (0) target = $region73
    $region72: #{_qnetwork_forward_impl.1} parent=1 // pred_region
      %127 = dma.done [#allocation5], 16
    $region73: #{_qnetwork_forward_impl.1} parent=1 // pred_fallthru
      _
    // Predicated region
    $region74: #{_qnetwork_forward_impl.1} parent=1 // pred_check
      _
    $region75: #{_qnetwork_forward_impl.1} parent=1 // pred_check_branch
      %129 = sbr.rel (0) target = $region77
    $region76: #{_qnetwork_forward_impl.1} parent=1 // pred_region
      %130 = dma.done [#allocation8], 16
    $region77: #{_qnetwork_forward_impl.1} parent=1 // pred_fallthru
      _
    // Predicated region
    $region78: #{_qnetwork_forward_impl.1} parent=1 // pred_check
      _
    $region79: #{_qnetwork_forward_impl.1} parent=1 // pred_check_branch
      %132 = sbr.rel (0) target = $region81
    $region80: #{_qnetwork_forward_impl.1} parent=1 // pred_region
      %133 = dma.done [#allocation8], 64
    $region81: #{_qnetwork_forward_impl.1} parent=1 // pred_fallthru
      _
    // Predicated region
    $region82: #{_qnetwork_forward_impl.1} parent=1 // pred_check
      _
    $region83: #{_qnetwork_forward_impl.1} parent=1 // pred_check_branch
      %135 = sbr.rel (0) target = $region85
    $region84: #{_qnetwork_forward_impl.1} parent=1 // pred_region
      %136 = dma.done [#allocation11], 16
    $region85: #{_qnetwork_forward_impl.1} parent=1 // pred_fallthru
      _
    // Predicated region
    $region86: #{_qnetwork_forward_impl.1} parent=1 // pred_check
      _
    $region87: #{_qnetwork_forward_impl.1} parent=1 // pred_check_branch
      %138 = sbr.rel (0) target = $region89
    $region88: #{_qnetwork_forward_impl.1} parent=1 // pred_region
      %139 = dma.done [#allocation11], 16
    $region89: #{_qnetwork_forward_impl.1} parent=1 // pred_fallthru
      _
    // Predicated region
    $region90: #{_qnetwork_forward_impl.1} parent=1 // pred_check
      _
    $region91: #{_qnetwork_forward_impl.1} parent=1 // pred_check_branch
      %141 = sbr.rel (0) target = $region93
    $region92: #{_qnetwork_forward_impl.1} parent=1 // pred_region
      %142 = dma.done [#allocation14], 16
    $region93: #{_qnetwork_forward_impl.1} parent=1 // pred_fallthru
      _
    %v144 = vld [vmem:[#allocation2] sm:$0xff]
    %v145 = vpack.c.bf16 %v144, %v144
    %v146 = vld [vmem:[#allocation4] sm:$0xff]
    %v147 = vpack.c.bf16 %v146, %v146
    %v148 = vld [vmem:[%s2] sm:$0xf]
    %v149 = vld [vmem:[%s2 + $0x4] sm:$0xf]
    %v150 = vld [vmem:[%s3] sm:$0xf]
    %vm151 = vcmask 64512
    %v153 = vsel %vm151, %v147, 0
    %vm155 = vcmask 1043456
    %v157 = vsel %vm155, %v150, 0
    %159 = vmatprep.subr.bf16.mxu0 0
    %160 = vmatpush1.bf16.msra.mxu0 0
    %161 = vmatprep.subr.bf16.mxu0 0
    %162 = vmatpush1.bf16.msra.mxu0 0
    %163 = vmatprep.subr.bf16.mxu0 0
    %164 = vmatpush1.bf16.msra.mxu0 0
    %165 = vmatprep.subr.bf16.mxu0 0
    %166 = vmatpush1.bf16.msra.mxu0 0
    %167 = vmatprep.subr.bf16.mxu0 0
    %168 = vmatpush1.bf16.msra.mxu0 0
    %169 = vmatprep.subr.bf16.mxu0 0
    %170 = vmatpush1.bf16.msra.mxu0 0
    %171 = vmatprep.subr.bf16.mxu0 0
    %172 = vmatpush1.bf16.msra.mxu0 0
    %173 = vmatprep.subr.bf16.mxu0 0
    %174 = vmatpush1.bf16.msra.mxu0 %v157
    %175 = vmatprep.subr.bf16.mxu0 0
    %176 = vmatpush2.bf16.msra.mxu0 0
    %177 = vmatprep.subr.bf16.mxu0 0
    %178 = vmatpush2.bf16.msra.mxu0 0
    %179 = vmatprep.subr.bf16.mxu0 0
    %180 = vmatpush2.bf16.msra.mxu0 0
    %181 = vmatprep.subr.bf16.mxu0 0
    %182 = vmatpush2.bf16.msra.mxu0 0
    %183 = vmatprep.subr.bf16.mxu0 0
    %184 = vmatpush2.bf16.msra.mxu0 0
    %185 = vmatprep.subr.bf16.mxu0 0
    %186 = vmatpush2.bf16.msra.mxu0 0
    %187 = vmatprep.subr.bf16.mxu0 0
    %188 = vmatpush2.bf16.msra.mxu0 0
    %189 = vmatprep.subr.bf16.mxu0 0
    %190 = vmatpush2.bf16.msra.mxu0 0
    %191 = vmatprep.mubr.bf16.mxu0 0
    %192 = vmatmul.mubr.bf16.gmra.mxu0 %v153
    %v193 = vpop.f32.mrf.mxu0
    %v194 = vadd.f32 0.0, %v193
    %v195 = vpop.f32.mrf.mxu0
    %v196 = vpop.f32.mrf.mxu0
    %v197 = vpop.f32.mrf.mxu0
    %198 = vdwg.mxu0
    %v201 = vunpack.c.l.b16 %v148
    %v202 = vunpack.c.l.b16 %v149
    %v203 = vpack.c.b16 %v202, %v201
    %vm205 = vcmask 130048
    %v207 = vsel %vm205, %v145, 0
    %209 = vmatprep.subr.bf16.mxu0 0
    %210 = vmatpush1.bf16.msra.mxu0 0
    %211 = vmatprep.subr.bf16.mxu0 0
    %212 = vmatpush1.bf16.msra.mxu0 0
    %213 = vmatprep.subr.bf16.mxu0 0
    %214 = vmatpush1.bf16.msra.mxu0 0
    %215 = vmatprep.subr.bf16.mxu0 0
    %216 = vmatpush1.bf16.msra.mxu0 0
    %217 = vmatprep.subr.bf16.mxu0 0
    %218 = vmatpush1.bf16.msra.mxu0 0
    %219 = vmatprep.subr.bf16.mxu0 0
    %220 = vmatpush1.bf16.msra.mxu0 0
    %221 = vmatprep.subr.bf16.mxu0 0
    %222 = vmatpush1.bf16.msra.mxu0 0
    %223 = vmatprep.subr.bf16.mxu0 0
    %224 = vmatpush1.bf16.msra.mxu0 %v203
    %225 = vmatprep.subr.bf16.mxu0 0
    %226 = vmatpush2.bf16.msra.mxu0 0
    %227 = vmatprep.subr.bf16.mxu0 0
    %228 = vmatpush2.bf16.msra.mxu0 0
    %229 = vmatprep.subr.bf16.mxu0 0
    %230 = vmatpush2.bf16.msra.mxu0 0
    %231 = vmatprep.subr.bf16.mxu0 0
    %232 = vmatpush2.bf16.msra.mxu0 0
    %233 = vmatprep.subr.bf16.mxu0 0
    %234 = vmatpush2.bf16.msra.mxu0 0
    %235 = vmatprep.subr.bf16.mxu0 0
    %236 = vmatpush2.bf16.msra.mxu0 0
    %237 = vmatprep.subr.bf16.mxu0 0
    %238 = vmatpush2.bf16.msra.mxu0 0
    %239 = vmatprep.subr.bf16.mxu0 0
    %240 = vmatpush2.bf16.msra.mxu0 0
    %241 = vmatprep.mubr.bf16.mxu0 0
    %242 = vmatmul.mubr.bf16.gmra.mxu0 %v207
    %v243 = vpop.f32.mrf.mxu0
    %v244 = vadd.f32 %v194, %v243
    %v245 = vpop.f32.mrf.mxu0
    %v246 = vpop.f32.mrf.mxu0
    %v247 = vpop.f32.mrf.mxu0
    %248 = vdwg.mxu0
    %v249 = vld [vmem:[#allocation6] sm:$0x1]
    %v251 = vlaneseq
    %v252 = vshrl.u32 %v251, 7
    %v253 = vsub.s32 0, %v252
    %v254 = vrot.slane %v249, %v253
    %v256 = vadd.f32 %v244, %v254
    %v257 = vmax.f32 %v256, 0.0
    %v258 = vpack.c.bf16 %v257, %v257
    %v259 = vld [vmem:[%s5] sm:$0xf]
    %v260 = vld [vmem:[%s5 + $0x4] sm:$0xf]
    %v261 = vld [vmem:[%s5 + $0x8] sm:$0xf]
    %v262 = vld [vmem:[%s5 + $0xc] sm:$0xf]
    %v263 = vld [vmem:[#allocation7] sm:$0x1]
    %v265 = vlaneseq
    %v266 = vshrl.u32 %v265, 7
    %v267 = vsub.s32 0, %v266
    %v268 = vrot.slane %v263, %v267
    %v274 = vunpack.c.l.b16 %v259
    %v275 = vunpack.c.l.b16 %v260
    %v276 = vunpack.c.l.b16 %v261
    %v277 = vunpack.c.l.b16 %v262
    %v278 = vpack.c.b16 %v275, %v274
    %v279 = vpack.c.b16 %v277, %v276
    %vm282 = vcmask 261120
    %v284 = vsel %vm282, %v258, 0
    %286 = vmatprep.subr.bf16.mxu0 0
    %287 = vmatpush1.bf16.msra.mxu0 0
    %288 = vmatprep.subr.bf16.mxu0 0
    %289 = vmatpush1.bf16.msra.mxu0 0
    %290 = vmatprep.subr.bf16.mxu0 0
    %291 = vmatpush1.bf16.msra.mxu0 0
    %292 = vmatprep.subr.bf16.mxu0 0
    %293 = vmatpush1.bf16.msra.mxu0 0
    %294 = vmatprep.subr.bf16.mxu0 0
    %295 = vmatpush1.bf16.msra.mxu0 0
    %296 = vmatprep.subr.bf16.mxu0 0
    %297 = vmatpush1.bf16.msra.mxu0 0
    %298 = vmatprep.subr.bf16.mxu0 0
    %299 = vmatpush1.bf16.msra.mxu0 %v279
    %300 = vmatprep.subr.bf16.mxu0 0
    %301 = vmatpush1.bf16.msra.mxu0 %v278
    %302 = vmatprep.subr.bf16.mxu0 0
    %303 = vmatpush2.bf16.msra.mxu0 0
    %304 = vmatprep.subr.bf16.mxu0 0
    %305 = vmatpush2.bf16.msra.mxu0 0
    %306 = vmatprep.subr.bf16.mxu0 0
    %307 = vmatpush2.bf16.msra.mxu0 0
    %308 = vmatprep.subr.bf16.mxu0 0
    %309 = vmatpush2.bf16.msra.mxu0 0
    %310 = vmatprep.subr.bf16.mxu0 0
    %311 = vmatpush2.bf16.msra.mxu0 0
    %312 = vmatprep.subr.bf16.mxu0 0
    %313 = vmatpush2.bf16.msra.mxu0 0
    %314 = vmatprep.subr.bf16.mxu0 0
    %315 = vmatpush2.bf16.msra.mxu0 0
    %316 = vmatprep.subr.bf16.mxu0 0
    %317 = vmatpush2.bf16.msra.mxu0 0
    %318 = vmatprep.mubr.bf16.mxu0 0
    %319 = vmatmul.mubr.bf16.gmra.mxu0 %v284
    %v320 = vpop.f32.mrf.mxu0
    %v321 = vadd.f32 %v268, %v320
    %v322 = vpop.f32.mrf.mxu0
    %v323 = vpop.f32.mrf.mxu0
    %v324 = vpop.f32.mrf.mxu0
    %325 = vdwg.mxu0
    %v326 = vmax.f32 %v321, 0.0
    %v327 = vpack.c.bf16 %v326, %v326
    %v328 = vld [vmem:[%s8] sm:$0xf]
    %v329 = vld [vmem:[%s8 + $0x4] sm:$0xf]
    %v330 = vld [vmem:[#allocation9] sm:$0xf]
    %v332 = vsel %vm155, %v330, 0
    %334 = vmatprep.subr.bf16.mxu0 0
    %335 = vmatpush1.bf16.msra.mxu0 0
    %336 = vmatprep.subr.bf16.mxu0 0
    %337 = vmatpush1.bf16.msra.mxu0 0
    %338 = vmatprep.subr.bf16.mxu0 0
    %339 = vmatpush1.bf16.msra.mxu0 0
    %340 = vmatprep.subr.bf16.mxu0 0
    %341 = vmatpush1.bf16.msra.mxu0 0
    %342 = vmatprep.subr.bf16.mxu0 0
    %343 = vmatpush1.bf16.msra.mxu0 0
    %344 = vmatprep.subr.bf16.mxu0 0
    %345 = vmatpush1.bf16.msra.mxu0 0
    %346 = vmatprep.subr.bf16.mxu0 0
    %347 = vmatpush1.bf16.msra.mxu0 0
    %348 = vmatprep.subr.bf16.mxu0 0
    %349 = vmatpush1.bf16.msra.mxu0 %v332
    %350 = vmatprep.subr.bf16.mxu0 0
    %351 = vmatpush2.bf16.msra.mxu0 0
    %352 = vmatprep.subr.bf16.mxu0 0
    %353 = vmatpush2.bf16.msra.mxu0 0
    %354 = vmatprep.subr.bf16.mxu0 0
    %355 = vmatpush2.bf16.msra.mxu0 0
    %356 = vmatprep.subr.bf16.mxu0 0
    %357 = vmatpush2.bf16.msra.mxu0 0
    %358 = vmatprep.subr.bf16.mxu0 0
    %359 = vmatpush2.bf16.msra.mxu0 0
    %360 = vmatprep.subr.bf16.mxu0 0
    %361 = vmatpush2.bf16.msra.mxu0 0
    %362 = vmatprep.subr.bf16.mxu0 0
    %363 = vmatpush2.bf16.msra.mxu0 0
    %364 = vmatprep.subr.bf16.mxu0 0
    %365 = vmatpush2.bf16.msra.mxu0 0
    %366 = vmatprep.mubr.bf16.mxu0 0
    %367 = vmatmul.mubr.bf16.gmra.mxu0 %v153
    %v368 = vpop.f32.mrf.mxu0
    %v369 = vadd.f32 0.0, %v368
    %v370 = vpop.f32.mrf.mxu0
    %v371 = vpop.f32.mrf.mxu0
    %v372 = vpop.f32.mrf.mxu0
    %373 = vdwg.mxu0
    %v376 = vunpack.c.l.b16 %v328
    %v377 = vunpack.c.l.b16 %v329
    %v378 = vpack.c.b16 %v377, %v376
    %380 = vmatprep.subr.bf16.mxu0 0
    %381 = vmatpush1.bf16.msra.mxu0 0
    %382 = vmatprep.subr.bf16.mxu0 0
    %383 = vmatpush1.bf16.msra.mxu0 0
    %384 = vmatprep.subr.bf16.mxu0 0
    %385 = vmatpush1.bf16.msra.mxu0 0
    %386 = vmatprep.subr.bf16.mxu0 0
    %387 = vmatpush1.bf16.msra.mxu0 0
    %388 = vmatprep.subr.bf16.mxu0 0
    %389 = vmatpush1.bf16.msra.mxu0 0
    %390 = vmatprep.subr.bf16.mxu0 0
    %391 = vmatpush1.bf16.msra.mxu0 0
    %392 = vmatprep.subr.bf16.mxu0 0
    %393 = vmatpush1.bf16.msra.mxu0 0
    %394 = vmatprep.subr.bf16.mxu0 0
    %395 = vmatpush1.bf16.msra.mxu0 %v378
    %396 = vmatprep.subr.bf16.mxu0 0
    %397 = vmatpush2.bf16.msra.mxu0 0
    %398 = vmatprep.subr.bf16.mxu0 0
    %399 = vmatpush2.bf16.msra.mxu0 0
    %400 = vmatprep.subr.bf16.mxu0 0
    %401 = vmatpush2.bf16.msra.mxu0 0
    %402 = vmatprep.subr.bf16.mxu0 0
    %403 = vmatpush2.bf16.msra.mxu0 0
    %404 = vmatprep.subr.bf16.mxu0 0
    %405 = vmatpush2.bf16.msra.mxu0 0
    %406 = vmatprep.subr.bf16.mxu0 0
    %407 = vmatpush2.bf16.msra.mxu0 0
    %408 = vmatprep.subr.bf16.mxu0 0
    %409 = vmatpush2.bf16.msra.mxu0 0
    %410 = vmatprep.subr.bf16.mxu0 0
    %411 = vmatpush2.bf16.msra.mxu0 0
    %412 = vmatprep.mubr.bf16.mxu0 0
    %413 = vmatmul.mubr.bf16.gmra.mxu0 %v207
    %v414 = vpop.f32.mrf.mxu0
    %v415 = vadd.f32 %v369, %v414
    %v416 = vpop.f32.mrf.mxu0
    %v417 = vpop.f32.mrf.mxu0
    %v418 = vpop.f32.mrf.mxu0
    %419 = vdwg.mxu0
    %v420 = vld [vmem:[#allocation10] sm:$0x1]
    %v422 = vlaneseq
    %v423 = vshrl.u32 %v422, 7
    %v424 = vsub.s32 0, %v423
    %v425 = vrot.slane %v420, %v424
    %v427 = vadd.f32 %v415, %v425
    %v428 = vmax.f32 %v427, 0.0
    %v429 = vpack.c.bf16 %v428, %v428
    %v430 = vld [vmem:[%s11] sm:$0xf]
    %v431 = vld [vmem:[%s11 + $0x4] sm:$0xf]
    %v432 = vld [vmem:[%s11 + $0x8] sm:$0xf]
    %v433 = vld [vmem:[%s11 + $0xc] sm:$0xf]
    %v434 = vld [vmem:[#allocation12] sm:$0x1]
    %v436 = vlaneseq
    %v437 = vshrl.u32 %v436, 7
    %v438 = vsub.s32 0, %v437
    %v439 = vrot.slane %v434, %v438
    %v445 = vunpack.c.l.b16 %v430
    %v446 = vunpack.c.l.b16 %v431
    %v447 = vunpack.c.l.b16 %v432
    %v448 = vunpack.c.l.b16 %v433
    %v449 = vpack.c.b16 %v446, %v445
    %v450 = vpack.c.b16 %v448, %v447
    %v454 = vsel %vm282, %v429, 0
    %456 = vmatprep.subr.bf16.mxu0 0
    %457 = vmatpush1.bf16.msra.mxu0 0
    %458 = vmatprep.subr.bf16.mxu0 0
    %459 = vmatpush1.bf16.msra.mxu0 0
    %460 = vmatprep.subr.bf16.mxu0 0
    %461 = vmatpush1.bf16.msra.mxu0 0
    %462 = vmatprep.subr.bf16.mxu0 0
    %463 = vmatpush1.bf16.msra.mxu0 0
    %464 = vmatprep.subr.bf16.mxu0 0
    %465 = vmatpush1.bf16.msra.mxu0 0
    %466 = vmatprep.subr.bf16.mxu0 0
    %467 = vmatpush1.bf16.msra.mxu0 0
    %468 = vmatprep.subr.bf16.mxu0 0
    %469 = vmatpush1.bf16.msra.mxu0 %v450
    %470 = vmatprep.subr.bf16.mxu0 0
    %471 = vmatpush1.bf16.msra.mxu0 %v449
    %472 = vmatprep.subr.bf16.mxu0 0
    %473 = vmatpush2.bf16.msra.mxu0 0
    %474 = vmatprep.subr.bf16.mxu0 0
    %475 = vmatpush2.bf16.msra.mxu0 0
    %476 = vmatprep.subr.bf16.mxu0 0
    %477 = vmatpush2.bf16.msra.mxu0 0
    %478 = vmatprep.subr.bf16.mxu0 0
    %479 = vmatpush2.bf16.msra.mxu0 0
    %480 = vmatprep.subr.bf16.mxu0 0
    %481 = vmatpush2.bf16.msra.mxu0 0
    %482 = vmatprep.subr.bf16.mxu0 0
    %483 = vmatpush2.bf16.msra.mxu0 0
    %484 = vmatprep.subr.bf16.mxu0 0
    %485 = vmatpush2.bf16.msra.mxu0 0
    %486 = vmatprep.subr.bf16.mxu0 0
    %487 = vmatpush2.bf16.msra.mxu0 0
    %488 = vmatprep.mubr.bf16.mxu0 0
    %489 = vmatmul.mubr.bf16.gmra.mxu0 %v454
    %v490 = vpop.f32.mrf.mxu0
    %v491 = vadd.f32 %v439, %v490
    %v492 = vpop.f32.mrf.mxu0
    %v493 = vpop.f32.mrf.mxu0
    %v494 = vpop.f32.mrf.mxu0
    %495 = vdwg.mxu0
    %v496 = vmax.f32 %v491, 0.0
    %v497 = vpack.c.bf16 %v496, %v496
    %v498 = vld [vmem:[%s7] sm:$0xf]
    %v499 = vld [vmem:[%s7 + $0x4] sm:$0xf]
    %v500 = vld [vmem:[%s7 + $0x8] sm:$0xf]
    %v501 = vld [vmem:[%s7 + $0xc] sm:$0xf]
    %v502 = vld [vmem:[%s13] sm:$0xf]
    %v503 = vld [vmem:[%s13 + $0x4] sm:$0xf]
    %v504 = vld [vmem:[%s13 + $0x8] sm:$0xf]
    %v505 = vld [vmem:[%s13 + $0xc] sm:$0xf]
    %v510 = vunpack.c.l.b16 %v502
    %v511 = vunpack.c.l.b16 %v503
    %v512 = vunpack.c.l.b16 %v504
    %v513 = vunpack.c.l.b16 %v505
    %v514 = vpack.c.b16 %v511, %v510
    %v515 = vpack.c.b16 %v513, %v512
    %v519 = vsel %vm282, %v497, 0
    %521 = vmatprep.subr.bf16.mxu0 0
    %522 = vmatpush1.bf16.msra.mxu0 0
    %523 = vmatprep.subr.bf16.mxu0 0
    %524 = vmatpush1.bf16.msra.mxu0 0
    %525 = vmatprep.subr.bf16.mxu0 0
    %526 = vmatpush1.bf16.msra.mxu0 0
    %527 = vmatprep.subr.bf16.mxu0 0
    %528 = vmatpush1.bf16.msra.mxu0 0
    %529 = vmatprep.subr.bf16.mxu0 0
    %530 = vmatpush1.bf16.msra.mxu0 0
    %531 = vmatprep.subr.bf16.mxu0 0
    %532 = vmatpush1.bf16.msra.mxu0 0
    %533 = vmatprep.subr.bf16.mxu0 0
    %534 = vmatpush1.bf16.msra.mxu0 %v515
    %535 = vmatprep.subr.bf16.mxu0 0
    %536 = vmatpush1.bf16.msra.mxu0 %v514
    %537 = vmatprep.subr.bf16.mxu0 0
    %538 = vmatpush2.bf16.msra.mxu0 0
    %539 = vmatprep.subr.bf16.mxu0 0
    %540 = vmatpush2.bf16.msra.mxu0 0
    %541 = vmatprep.subr.bf16.mxu0 0
    %542 = vmatpush2.bf16.msra.mxu0 0
    %543 = vmatprep.subr.bf16.mxu0 0
    %544 = vmatpush2.bf16.msra.mxu0 0
    %545 = vmatprep.subr.bf16.mxu0 0
    %546 = vmatpush2.bf16.msra.mxu0 0
    %547 = vmatprep.subr.bf16.mxu0 0
    %548 = vmatpush2.bf16.msra.mxu0 0
    %549 = vmatprep.subr.bf16.mxu0 0
    %550 = vmatpush2.bf16.msra.mxu0 0
    %551 = vmatprep.subr.bf16.mxu0 0
    %552 = vmatpush2.bf16.msra.mxu0 0
    %553 = vmatprep.mubr.bf16.mxu0 0
    %554 = vmatmul.mubr.bf16.gmra.mxu0 %v519
    %v555 = vpop.f32.mrf.mxu0
    %v556 = vadd.f32 0.0, %v555
    %v557 = vpop.f32.mrf.mxu0
    %v558 = vpop.f32.mrf.mxu0
    %v559 = vpop.f32.mrf.mxu0
    %560 = vdwg.mxu0
    %v565 = vunpack.c.l.b16 %v498
    %v566 = vunpack.c.l.b16 %v499
    %v567 = vunpack.c.l.b16 %v500
    %v568 = vunpack.c.l.b16 %v501
    %v569 = vpack.c.b16 %v566, %v565
    %v570 = vpack.c.b16 %v568, %v567
    %v574 = vsel %vm282, %v327, 0
    %576 = vmatprep.subr.bf16.mxu0 0
    %577 = vmatpush1.bf16.msra.mxu0 0
    %578 = vmatprep.subr.bf16.mxu0 0
    %579 = vmatpush1.bf16.msra.mxu0 0
    %580 = vmatprep.subr.bf16.mxu0 0
    %581 = vmatpush1.bf16.msra.mxu0 0
    %582 = vmatprep.subr.bf16.mxu0 0
    %583 = vmatpush1.bf16.msra.mxu0 0
    %584 = vmatprep.subr.bf16.mxu0 0
    %585 = vmatpush1.bf16.msra.mxu0 0
    %586 = vmatprep.subr.bf16.mxu0 0
    %587 = vmatpush1.bf16.msra.mxu0 0
    %588 = vmatprep.subr.bf16.mxu0 0
    %589 = vmatpush1.bf16.msra.mxu0 %v570
    %590 = vmatprep.subr.bf16.mxu0 0
    %591 = vmatpush1.bf16.msra.mxu0 %v569
    %592 = vmatprep.subr.bf16.mxu0 0
    %593 = vmatpush2.bf16.msra.mxu0 0
    %594 = vmatprep.subr.bf16.mxu0 0
    %595 = vmatpush2.bf16.msra.mxu0 0
    %596 = vmatprep.subr.bf16.mxu0 0
    %597 = vmatpush2.bf16.msra.mxu0 0
    %598 = vmatprep.subr.bf16.mxu0 0
    %599 = vmatpush2.bf16.msra.mxu0 0
    %600 = vmatprep.subr.bf16.mxu0 0
    %601 = vmatpush2.bf16.msra.mxu0 0
    %602 = vmatprep.subr.bf16.mxu0 0
    %603 = vmatpush2.bf16.msra.mxu0 0
    %604 = vmatprep.subr.bf16.mxu0 0
    %605 = vmatpush2.bf16.msra.mxu0 0
    %606 = vmatprep.subr.bf16.mxu0 0
    %607 = vmatpush2.bf16.msra.mxu0 0
    %608 = vmatprep.mubr.bf16.mxu0 0
    %609 = vmatmul.mubr.bf16.gmra.mxu0 %v574
    %v610 = vpop.f32.mrf.mxu0
    %v611 = vadd.f32 %v556, %v610
    %v612 = vpop.f32.mrf.mxu0
    %v613 = vpop.f32.mrf.mxu0
    %v614 = vpop.f32.mrf.mxu0
    %615 = vdwg.mxu0
    %v616 = vld [vmem:[#allocation13] sm:$0x1]
    %v618 = vlaneseq
    %v619 = vshrl.u32 %v618, 7
    %v620 = vsub.s32 0, %v619
    %v621 = vrot.slane %v616, %v620
    %v623 = vadd.f32 %v611, %v621
    %vm624 = vcmask 15360
    %625 = vst.msk [vmem:[%s15] sm:$0xff] %vm624, %v623
    // Predicated region
    $region94: #{_qnetwork_forward_impl.1} parent=1 // pred_check
      _
    $region95: #{_qnetwork_forward_impl.1} parent=1 // pred_check_branch
      %627 = sbr.rel (0) target = $region97
    $region96: #{_qnetwork_forward_impl.1} parent=1 // pred_region
      _
    $region97: #{_qnetwork_forward_impl.1} parent=1 // pred_fallthru
      _
    // Predicated region
    $region98: #{_qnetwork_forward_impl.1} parent=1 // pred_check
      _
    $region99: #{_qnetwork_forward_impl.1} parent=1 // pred_check_branch
      %629 = sbr.rel (0) target = $region101
    $region100: #{_qnetwork_forward_impl.1} parent=1 // pred_region
      _
    $region101: #{_qnetwork_forward_impl.1} parent=1 // pred_fallthru
      _
    %630 = vsyncpa [#allocation3], 1
    %631 = vsyncpa [#allocation5], 1
    %632 = vsyncpa [#allocation8], 1
    %633 = vsyncpa [#allocation11], 1
    %634 = vsyncpa [#allocation14], 1

</llo_original>
